<compile_context>
chip_gen: v5e
topology: v5e:2x2
jax: 0.10.0
libtpu: 0.0.40
codegen_flags: <defaults>
</compile_context>

<pallas_src>
import functools

import jax
import jax.numpy as jnp
from jax.experimental import pallas as pl
from jax.experimental.pallas import tpu as pltpu


def _maxpool_kernel(xw_ref, o_ref):
    # xw_ref: (K, tm, tl) window-phase slabs;  o_ref: (tm, tl)
    # Elementwise max across the leading (non-lane) axis -> pure VPU work.
    o_ref[...] = jnp.max(xw_ref[...], axis=0)


def _pick_tiles(M, L_out, K, itemsize, vmem_budget_bytes=16 * 1024 * 1024):
    # Lane tile: multiple of 128 when possible (unmasked lane-dense stores),
    # else the full (small) dimension.
    if L_out >= 128:
        tl = min((L_out // 128) * 128, 2048)
    else:
        tl = L_out
    # Sublane multiple depends on dtype packing: f32 -> 8, bf16 -> 16, i8 -> 32.
    sub = max(8, 32 // max(1, itemsize))
    # Row tile: multiple of `sub`, sized so the double-buffered input block
    # (K*tm*tl) plus output block (tm*tl) fit the VMEM budget.
    per_row_bytes = 2 * (K + 1) * tl * itemsize  # 2x for double buffering
    tm_cap = max(sub, vmem_budget_bytes // per_row_bytes)
    tm_cap = (tm_cap // sub) * sub
    if M <= sub:
        tm = M                       # full dim -> always a legal block
    else:
        tm = max(sub, min(tm_cap, 1024, (M // sub) * sub))
    return tm, tl


@functools.partial(jax.jit, static_argnames=("kernel_size",))
def maxpool1d_pad_same(x, *, kernel_size):
    """x: (B, C, L) -> (B, C, L_out), matching the PyTorch module's forward."""
    K = int(kernel_size)
    B, C, L = x.shape
    if K == 1:
        return x  # p == 0 and stride-1 pooling is the identity

    # Same arithmetic as the PyTorch module (pad computed with stride=1,
    # pooling stride = K, floor mode).
    pad_left = (K - 1) // 2
    L_out = (L - 1) // K + 1          # == ((L + K - 1) - K) // K + 1
    total = L_out * K                 # padded positions actually consumed

    M = B * C
    x2 = x.reshape(M, L)
    right = total - L - pad_left      # may be negative (floor-mode truncation)
    xp = jnp.pad(x2, ((0, 0), (pad_left, max(0, right))))[:, :total]
    # Phase slabs: (K, M, L_out); slab k = padded positions k, K+k, 2K+k, ...
    # (pad + reshape + transpose fuse into one XLA copy under jit.)
    xw = xp.reshape(M, L_out, K).transpose(2, 0, 1)

    tm, tl = _pick_tiles(M, L_out, K, x.dtype.itemsize)
    grid = (pl.cdiv(M, tm), pl.cdiv(L_out, tl))

    bytes_accessed = (K * M * L_out + M * L_out) * x.dtype.itemsize
    out = pl.pallas_call(
        _maxpool_kernel,
        out_shape=jax.ShapeDtypeStruct((M, L_out), x.dtype),
        grid_spec=pltpu.PrefetchScalarGridSpec(
            num_scalar_prefetch=0,
            grid=grid,
            in_specs=[pl.BlockSpec((K, tm, tl), lambda i, j: (0, i, j))],
            out_specs=pl.BlockSpec((tm, tl), lambda i, j: (i, j)),
        ),
        compiler_params=pltpu.CompilerParams(
            dimension_semantics=(pltpu.PARALLEL, pltpu.PARALLEL),
        ),
        cost_estimate=pl.CostEstimate(
            flops=K * M * L_out, transcendentals=0, bytes_accessed=bytes_accessed
        ),
    )(xw)
    return out.reshape(B, C, L_out)


def _ref_forward(x, kernel_size):
    """Pure-JAX mirror of the PyTorch forward (F.pad 'constant' 0 + MaxPool1d)."""
    K = kernel_size
    stride = 1
    L = x.shape[-1]
    out_dim = (L + stride - 1) // stride
    p = max(0, (out_dim - 1) * stride + K - L)
    pad_l, pad_r = p // 2, p - p // 2
    xp = jnp.pad(x, ((0, 0), (0, 0), (pad_l, pad_r)))
    Lp = xp.shape[-1]
    L_out = (Lp - K) // K + 1
    xw = xp[..., : L_out * K].reshape(x.shape[0], x.shape[1], L_out, K)
    return xw.max(axis=-1)


if __name__ == "__main__":
    B, C, L = 2, 4, 16
    key = jax.random.PRNGKey(0)
    x = jax.random.normal(key, (B, C, L), dtype=jnp.float32)

    # K=3: standard SAME pooling; K=4: L % K == 0 exercises floor-mode
    # truncation of the trailing real samples (must match PyTorch exactly).
    for K in (3, 4):
        out = jax.block_until_ready(maxpool1d_pad_same(x, kernel_size=K))
        ref = _ref_forward(x, K)
        assert out.shape == ref.shape, (out.shape, ref.shape)
        assert jnp.allclose(out, ref), f"mismatch for kernel_size={K}"

    print("KERNEL_OK")
</pallas_src>

<mosaic_0001>
module attributes {stable_mosaic.version = 11 : i64} {
  func.func @_maxpool_kernel(%arg0: i32, %arg1: i32, %arg2: memref<3x8x6xf32, #tpu.memory_space<vmem>>, %arg3: memref<8x6xf32, #tpu.memory_space<vmem>>) attributes {dimension_semantics = [#tpu.dimension_semantics<parallel>, #tpu.dimension_semantics<parallel>], iteration_bounds = array<i64: 1, 1>, scalar_prefetch = 0 : i64, scratch_operands = 0 : i64, tpu.core_type = #tpu.core_type<tc>, window_params = [{transform_indices = @transform_0, window_bounds = array<i64: 3, 8, 6>}, {transform_indices = @transform_1, window_bounds = array<i64: 8, 6>}]} {
    %c0 = arith.constant 0 : index
    %c0_0 = arith.constant 0 : index
    %c0_1 = arith.constant 0 : index
    %0 = vector.load %arg2[%c0, %c0_0, %c0_1] : memref<3x8x6xf32, #tpu.memory_space<vmem>>, vector<3x8x6xf32>
    %cst = arith.constant dense<0xFF800000> : vector<8x6xf32>
    %1 = vector.multi_reduction <maximumf>, %0, %cst [0] : vector<3x8x6xf32> to vector<8x6xf32>
    %c0_2 = arith.constant 0 : index
    %c0_3 = arith.constant 0 : index
    %2 = vector.load %arg3[%c0_2, %c0_3] : memref<8x6xf32, #tpu.memory_space<vmem>>, vector<8x6xf32>
    tpu.vector_store %arg3[%c0_2, %c0_3], %1 {strides = array<i32>} : memref<8x6xf32, #tpu.memory_space<vmem>>, vector<8x6xf32>,
    return
  }
  func.func @transform_0(%arg0: i32, %arg1: i32) -> (i32, i32, i32) {
    %c0_i32 = arith.constant 0 : i32
    %c0_i32_0 = arith.constant 0 : i32
    return %c0_i32, %arg0, %arg1 : i32, i32, i32
  }
  func.func @transform_1(%arg0: i32, %arg1: i32) -> (i32, i32) {
    %c0_i32 = arith.constant 0 : i32
    return %arg0, %arg1 : i32, i32
  }
}

</mosaic_0001>

<llo_original>
// kernel: maxpool1d_pad_same.1
$region0: #{maxpool1d_pad_same.1}
  #allocation0 [shape = 'u32[]', space=smem, size = 0x4, offset = 0x4, fixed_abs, tag = 'smem constant byte address 0x4 - core index']
  #allocation1 [shape = 'u32[72,128]{1,0:T(1,128)}', space=vmem, size = 0x9000, scoped, tag = 'internal scratch']
  %s0 = inlined_call_operand.vmem [shape: f32[3,8,6], index: 0, kind: input, shape index: {}]
  %s1 = inlined_call_operand.hbm [shape: f32[8,6], index: 1, kind: output, shape index: {}]
  %s2 = sld [smem:[#allocation0]]
  $region14: #{maxpool1d_pad_same.1} parent=0
    _
  %s4 = ssub.s32 1, %s2
  %s5 = scalar_select 0, %s4, %s2
  $region1: #{maxpool1d_pad_same.1} parent=0
    #allocation2 [shape = 'u8[4096]{0}', space=vmem, size = 0x1000, scoped, tag = 'output window, operand 0, single buffered']
    #allocation3 [shape = 's32[1]{0}', space=sflag, size = 0x4, scoped, tag = 'scoped memory for maxpool1d_pad_same.1']
    %6 = vsyncpa [#allocation3], 0
    // Predicated region
    $region2: #{maxpool1d_pad_same.1} parent=1 // pred_check
      _
    $region3: #{maxpool1d_pad_same.1} parent=1 // pred_check_branch
      %8 = sbr.rel (0) target = $region5
    $region4: #{maxpool1d_pad_same.1} parent=1 // pred_region
      _
    $region5: #{maxpool1d_pad_same.1} parent=1 // pred_fallthru
      _
    %v9 = vld [vmem:[%s0] sm:$0xff]
    %v10 = vld [vmem:[%s0 + $0x8] sm:$0xff]
    %v11 = vld [vmem:[%s0 + $0x10] sm:$0xff]
    %vm12 = vcmask 48128
    %v13 = vsel %vm12, %v9, -inf
    %v14 = vsel %vm12, %v10, -inf
    %v15 = vsel %vm12, %v11, -inf
    %v16 = vmax.f32 %v13, %v14
    %v17 = vmax.f32 %v16, %v15
    %18 = vst.msk [vmem:[#allocation2] sm:$0xff] %vm12, %v17
    // Predicated region
    $region6: #{maxpool1d_pad_same.1} parent=1 // pred_check
      _
    $region7: #{maxpool1d_pad_same.1} parent=1 // pred_check_branch
      %20 = sbr.rel (0) target = $region9
    $region8: #{maxpool1d_pad_same.1} parent=1 // pred_region
      %22 = vsyncadd [#allocation3], 0
      %s24 = sshll.u32 [#allocation2], 4
      %s25 = int_to_ptr.vmem [resolvable:$true] %s24
      %s26 = sshll.u32 %s1, 4
      %s27 = int_to_ptr.hbm [resolvable:$true] %s26
      %29 = dma.vmem_to_hbm [thread:$0]  %s25, 128, %s27, [#allocation3]
    $region9: #{maxpool1d_pad_same.1} parent=1 // pred_fallthru
      _
    // Predicated region
    $region10: #{maxpool1d_pad_same.1} parent=1 // pred_check
      _
    $region11: #{maxpool1d_pad_same.1} parent=1 // pred_check_branch
      %31 = sbr.rel (0) target = $region13
    $region12: #{maxpool1d_pad_same.1} parent=1 // pred_region
      %33 = dma.done [#allocation3], 128
    $region13: #{maxpool1d_pad_same.1} parent=1 // pred_fallthru
      _
    %34 = vsyncpa [#allocation3], 1

</llo_original>
